<compile_context>
chip_gen: v7x
topology: tpu7x:2x2x1
jax: 0.10.0
libtpu: 0.0.40
codegen_flags: <defaults>
</compile_context>

<pallas_src>
import math
import functools

import jax
import jax.numpy as jnp
from jax.experimental import pallas as pl
from jax.experimental.pallas import tpu as pltpu


# ----------------------------------------------------------------------------
# Config (small synthetic sizes consistent with the module's __init__)
# ----------------------------------------------------------------------------
NUM_CLASSES   = 4
NUM_PROPOSALS = 8
HIDDEN_DIM    = 32
NUM_HEADS     = 2          # number of iterative head stages
FFN_DIM       = 64
STRIDE        = 4          # backbone output stride
CLS_BOX       = NUM_CLASSES + 4   # concatenated (class logits | box deltas)
PIXEL_MEAN    = [103.53, 116.28, 123.675]
PIXEL_STD     = [57.375, 57.12, 58.395]


# ----------------------------------------------------------------------------
# Pallas kernel 1: fused (normalize-folded) stem + global-average pool
# ----------------------------------------------------------------------------
def _stem_pool_kernel(x_ref, w1_ref, b1_ref, w2_ref, b2_ref, pmat_ref, pool_ref):
    # x_ref:   (M, 3)   flattened, stride-downsampled RAW pixels (normalization
    #                    is already folded into w1/b1)
    # pmat:    (S, M)   block-diagonal averaging matrix -> per-image mean feature
    h = jnp.dot(x_ref[...], w1_ref[...], preferred_element_type=jnp.float32)
    h = jnp.maximum(h + b1_ref[...], 0.0)
    h = jnp.dot(h, w2_ref[...], preferred_element_type=jnp.float32)
    h = jnp.maximum(h + b2_ref[...], 0.0)
    pool_ref[...] = jnp.dot(pmat_ref[...], h, preferred_element_type=jnp.float32)


def backbone_pooled(params, images_nhwc):
    """images_nhwc: (S, H, W, 3) RAW pixels -> pooled features (S, HIDDEN_DIM)."""
    x = images_nhwc[:, ::STRIDE, ::STRIDE, :]          # stride-4 downsample (XLA slice)
    S, Hf, Wf, C = x.shape
    hw = Hf * Wf
    M = S * hw
    flat = x.reshape(M, C)

    # per-image global-average pool as a matmul (rows of `flat` are image-major)
    pmat = jnp.repeat(jnp.eye(S, dtype=jnp.float32), hw, axis=1) / jnp.float32(hw)

    # fold pixel normalization (x - mean) / std into the first 1x1 conv
    mean = params["pixel_mean"]
    std = params["pixel_std"]
    w1f = params["stem_w1"] / std[:, None]
    b1f = params["stem_b1"] - (mean / std) @ params["stem_w1"]

    return pl.pallas_call(
        _stem_pool_kernel,
        out_shape=jax.ShapeDtypeStruct((S, HIDDEN_DIM), jnp.float32),
    )(flat, w1f, b1f.reshape(1, HIDDEN_DIM),
      params["stem_w2"], params["stem_b2"].reshape(1, HIDDEN_DIM), pmat)


# ----------------------------------------------------------------------------
# Pallas kernel 2: fused iterative head (all stages, one image per grid step)
# ----------------------------------------------------------------------------
def _head_kernel(pf_ref, img_ref,
                 wq_ref, wk_ref, wv_ref, wo_ref,
                 w1_ref, b1_ref, w2_ref, b2_ref,
                 wcb_ref, bcb_ref, out_ref, *, scale):
    # pf_ref:  (1, P, D) initial proposal features for this image
    # img_ref: (1, 1, D) pooled image feature
    # stacked weights: leading dim = NUM_HEADS (stage index)
    # out_ref: (NUM_HEADS, 1, P, CLS_BOX) per-stage concatenated (logits | deltas)
    pf = pf_ref[0]                                     # (P, D)
    imgf = img_ref[0]                                  # (1, D)

    for s in range(NUM_HEADS):                         # static unroll over stages
        x = pf + imgf                                  # add RoI (global) feature
        # single-head self-attention
        q = jnp.dot(x, wq_ref[s], preferred_element_type=jnp.float32)
        k = jnp.dot(x, wk_ref[s], preferred_element_type=jnp.float32)
        v = jnp.dot(x, wv_ref[s], preferred_element_type=jnp.float32)
        sc = jnp.dot(q, k.T, preferred_element_type=jnp.float32) * scale
        sc = sc - jnp.max(sc, axis=-1, keepdims=True)
        p = jnp.exp(sc)
        p = p * pl.reciprocal(jnp.sum(p, axis=-1, keepdims=True), approx=True)
        a = jnp.dot(p, v, preferred_element_type=jnp.float32)
        y = x + jnp.dot(a, wo_ref[s], preferred_element_type=jnp.float32)
        # layer-norm (no affine) over the feature dim
        mu = jnp.mean(y, axis=-1, keepdims=True)
        var = jnp.mean((y - mu) * (y - mu), axis=-1, keepdims=True)
        y = (y - mu) * jax.lax.rsqrt(var + 1e-5)
        # FFN + residual
        h = jnp.dot(y, w1_ref[s], preferred_element_type=jnp.float32) + b1_ref[s]
        h = jnp.maximum(h, 0.0)
        y = y + jnp.dot(h, w2_ref[s], preferred_element_type=jnp.float32) + b2_ref[s]
        pf = y
        # concatenated class + box-delta head (one matmul, one store)
        out = jnp.dot(y, wcb_ref[s], preferred_element_type=jnp.float32) + bcb_ref[s]
        out_ref[s, 0] = out.astype(out_ref.dtype)


def run_reference_head(params, pf0, img_feat):
    """pf0: (S, P, D) init proposal features; img_feat: (S, D) pooled features.

    Returns (NUM_HEADS, S, P, CLS_BOX) per-stage concatenated class logits + deltas.
    """
    S, P, D = pf0.shape
    hs = params["head_stages"]
    stack = lambda name: jnp.stack([hp[name] for hp in hs])

    wq, wk, wv, wo = stack("wq"), stack("wk"), stack("wv"), stack("wo")
    w1, w2 = stack("w1"), stack("w2")
    b1 = stack("b1").reshape(NUM_HEADS, 1, FFN_DIM)
    b2 = stack("b2").reshape(NUM_HEADS, 1, D)
    wcb = jnp.concatenate([stack("wc"), stack("wb")], axis=-1)          # (NH, D, C+4)
    bcb = jnp.concatenate([stack("bc"), stack("bb")], axis=-1)
    bcb = bcb.reshape(NUM_HEADS, 1, CLS_BOX)

    kern = functools.partial(_head_kernel, scale=1.0 / math.sqrt(D))

    def rep(shape):
        return pl.BlockSpec(shape, lambda s, _n=len(shape): (0,) * _n)

    return pl.pallas_call(
        kern,
        out_shape=jax.ShapeDtypeStruct((NUM_HEADS, S, P, CLS_BOX), jnp.float32),
        grid=(S,),
        in_specs=[
            pl.BlockSpec((1, P, D), lambda s: (s, 0, 0)),
            pl.BlockSpec((1, 1, D), lambda s: (s, 0, 0)),
            rep((NUM_HEADS, D, D)), rep((NUM_HEADS, D, D)),
            rep((NUM_HEADS, D, D)), rep((NUM_HEADS, D, D)),
            rep((NUM_HEADS, D, FFN_DIM)), rep((NUM_HEADS, 1, FFN_DIM)),
            rep((NUM_HEADS, FFN_DIM, D)), rep((NUM_HEADS, 1, D)),
            rep((NUM_HEADS, D, CLS_BOX)), rep((NUM_HEADS, 1, CLS_BOX)),
        ],
        out_specs=pl.BlockSpec((NUM_HEADS, 1, P, CLS_BOX), lambda s: (0, s, 0, 0)),
        compiler_params=pltpu.CompilerParams(
            dimension_semantics=("parallel",)),        # shards across v7x's 2 TCs
    )(pf0, img_feat.reshape(S, 1, D), wq, wk, wv, wo, w1, b1, w2, b2, wcb, bcb)


# ----------------------------------------------------------------------------
# Plain-JAX glue (box math, parameter setup, top-k selection)
# ----------------------------------------------------------------------------
def box_cxcywh_to_xyxy(boxes):
    cx, cy, w, h = boxes[..., 0], boxes[..., 1], boxes[..., 2], boxes[..., 3]
    return jnp.stack([cx - 0.5 * w, cy - 0.5 * h, cx + 0.5 * w, cy + 0.5 * h], axis=-1)


def apply_deltas(deltas, boxes_xyxy):
    w = boxes_xyxy[..., 2] - boxes_xyxy[..., 0]
    h = boxes_xyxy[..., 3] - boxes_xyxy[..., 1]
    cx = boxes_xyxy[..., 0] + 0.5 * w
    cy = boxes_xyxy[..., 1] + 0.5 * h
    dx, dy, dw, dh = deltas[..., 0], deltas[..., 1], deltas[..., 2], deltas[..., 3]
    ncx = cx + dx * w
    ncy = cy + dy * h
    nw = w * jnp.exp(jnp.clip(dw, -4.0, 4.0))
    nh = h * jnp.exp(jnp.clip(dh, -4.0, 4.0))
    return jnp.stack([ncx - 0.5 * nw, ncy - 0.5 * nh,
                      ncx + 0.5 * nw, ncy + 0.5 * nh], axis=-1)


def build_params(key):
    """Deterministic parameter init mirroring the module's __init__ shapes."""
    def dense(k, fan_in, fan_out):
        kw, kb = jax.random.split(k)
        w = jax.random.normal(kw, (fan_in, fan_out), jnp.float32) * 0.02
        b = jax.random.normal(kb, (fan_out,), jnp.float32) * 0.02
        return w, b

    keys = iter(jax.random.split(key, 128))
    params = {}

    params["pixel_mean"] = jnp.array(PIXEL_MEAN, jnp.float32)
    params["pixel_std"] = jnp.array(PIXEL_STD, jnp.float32)

    # backbone stem (1x1 conv 3 -> HIDDEN_DIM, then HIDDEN_DIM -> HIDDEN_DIM)
    params["stem_w1"], params["stem_b1"] = dense(next(keys), 3, HIDDEN_DIM)
    params["stem_w2"], params["stem_b2"] = dense(next(keys), HIDDEN_DIM, HIDDEN_DIM)

    # nn.Embedding(num_proposals, hidden_dim) / (num_proposals, 4)
    params["init_proposal_features"] = (
        jax.random.normal(next(keys), (NUM_PROPOSALS, HIDDEN_DIM), jnp.float32))
    params["reference_init_proposal_features"] = (
        jax.random.normal(next(keys), (NUM_PROPOSALS, HIDDEN_DIM), jnp.float32))
    # constant init: cxcy = 0.5, wh = 1.0
    params["init_proposal_boxes"] = jnp.concatenate(
        [jnp.full((NUM_PROPOSALS, 2), 0.5, jnp.float32),
         jnp.full((NUM_PROPOSALS, 2), 1.0, jnp.float32)], axis=-1)

    # shared ReferenceDynamicHead: NUM_HEADS iterative stages
    stages = []
    for _ in range(NUM_HEADS):
        hp = {}
        hp["wq"], _ = dense(next(keys), HIDDEN_DIM, HIDDEN_DIM)
        hp["wk"], _ = dense(next(keys), HIDDEN_DIM, HIDDEN_DIM)
        hp["wv"], _ = dense(next(keys), HIDDEN_DIM, HIDDEN_DIM)
        hp["wo"], _ = dense(next(keys), HIDDEN_DIM, HIDDEN_DIM)
        hp["w1"], hp["b1"] = dense(next(keys), HIDDEN_DIM, FFN_DIM)
        hp["w2"], hp["b2"] = dense(next(keys), FFN_DIM, HIDDEN_DIM)
        hp["wc"], hp["bc"] = dense(next(keys), HIDDEN_DIM, NUM_CLASSES)
        hp["wb"], hp["bb"] = dense(next(keys), HIDDEN_DIM, 4)
        stages.append(hp)
    params["head_stages"] = stages
    return params


def inference_topk(box_cls, box_pred):
    """use_focal=True branch: sigmoid scores, top-NUM_PROPOSALS over (P*K)."""
    scores = jax.nn.sigmoid(box_cls)                               # tiny; fused by XLA
    B, P, K = scores.shape
    flat_scores = scores.reshape(B, P * K)
    labels = jnp.tile(jnp.arange(K, dtype=jnp.int32)[None, :], (P, 1)).reshape(-1)
    topk_scores, topk_idx = jax.lax.top_k(flat_scores, P)          # glue (no Pallas topk)
    topk_labels = labels[topk_idx]                                 # (B, P)
    boxes_rep = jnp.repeat(box_pred, K, axis=1)                    # (B, P*K, 4)
    topk_boxes = jnp.take_along_axis(boxes_rep, topk_idx[..., None], axis=1)
    return topk_scores, topk_labels, topk_boxes


def forward(params, images_nchw, reference_images_nchw):
    """Inference forward pass of ReferenceSparseRCNN (eval mode)."""
    B, C, H, W = images_nchw.shape
    S = 2 * B   # main + reference streams processed together (shared weights)

    imgs = jnp.concatenate(
        [jnp.transpose(images_nchw, (0, 2, 3, 1)),
         jnp.transpose(reference_images_nchw, (0, 2, 3, 1))], axis=0)   # (S,H,W,3)
    whwh = jnp.tile(jnp.array([[W, H, W, H]], jnp.float32), (S, 1))     # (S, 4)

    # fused backbone: normalization folded + stem matmuls + global pool, 1 kernel
    img_feat = backbone_pooled(params, imgs)                            # (S, D)

    # initial proposal boxes: cxcywh -> xyxy, scaled by image whwh
    init_xyxy = box_cxcywh_to_xyxy(params["init_proposal_boxes"])       # (P, 4)
    boxes = init_xyxy[None] * whwh[:, None, :]                          # (S, P, 4)

    # initial proposal features per stream (main uses init_*, ref uses reference_*)
    pf0 = jnp.concatenate(
        [jnp.broadcast_to(params["init_proposal_features"][None],
                          (B, NUM_PROPOSALS, HIDDEN_DIM)),
         jnp.broadcast_to(params["reference_init_proposal_features"][None],
                          (B, NUM_PROPOSALS, HIDDEN_DIM))], axis=0)     # (S, P, D)

    # fused iterative head: ALL stages, BOTH streams, 1 kernel launch
    head_out = run_reference_head(params, pf0, img_feat)                # (NH,S,P,C+4)
    outputs_class = head_out[..., :NUM_CLASSES]                         # (NH,S,P,K)
    deltas_all = head_out[..., NUM_CLASSES:]                            # (NH,S,P,4)

    # per-stage box recursion (boxes never feed back into the head here)
    coords = []
    for s in range(NUM_HEADS):
        boxes = apply_deltas(deltas_all[s], boxes)
        boxes = jnp.clip(boxes, 0.0, whwh[:, None, :])
        coords.append(boxes)
    outputs_coord = jnp.stack(coords)                                   # (NH,S,P,4)

    cls_main, cls_ref = outputs_class[:, :B], outputs_class[:, B:]
    coord_main, coord_ref = outputs_coord[:, :B], outputs_coord[:, B:]

    # eval branch: inference on the main stream's last-stage outputs
    scores, labels, pred_boxes = inference_topk(cls_main[-1], coord_main[-1])
    return {
        "scores": scores,
        "pred_classes": labels,
        "pred_boxes": pred_boxes,
        "pred_logits": cls_main[-1],
        "reference_pred_logits": cls_ref[-1],
        "reference_pred_boxes": coord_ref[-1],
    }


# ----------------------------------------------------------------------------
if __name__ == "__main__":
    key = jax.random.PRNGKey(0)
    k_img, k_ref = jax.random.split(key)
    B, C, H, W = 2, 3, 32, 32
    images = jax.random.uniform(k_img, (B, C, H, W), jnp.float32) * 255.0
    reference_images = jax.random.uniform(k_ref, (B, C, H, W), jnp.float32) * 255.0

    params = build_params(jax.random.PRNGKey(42))

    out = forward(params, images, reference_images)
    jax.block_until_ready(out)

    assert out["scores"].shape == (B, NUM_PROPOSALS)
    assert out["pred_boxes"].shape == (B, NUM_PROPOSALS, 4)
    assert out["pred_logits"].shape == (B, NUM_PROPOSALS, NUM_CLASSES)
    assert out["reference_pred_boxes"].shape == (B, NUM_PROPOSALS, 4)
    print("KERNEL_OK")
</pallas_src>

<mosaic_0001>
module attributes {stable_mosaic.version = 11 : i64} {
  func.func @_stem_pool_kernel(%arg0: memref<256x3xf32, #tpu.memory_space<vmem>>, %arg1: memref<3x32xf32, #tpu.memory_space<vmem>>, %arg2: memref<1x32xf32, #tpu.memory_space<vmem>>, %arg3: memref<32x32xf32, #tpu.memory_space<vmem>>, %arg4: memref<1x32xf32, #tpu.memory_space<vmem>>, %arg5: memref<4x256xf32, #tpu.memory_space<vmem>>, %arg6: memref<4x32xf32, #tpu.memory_space<vmem>>) attributes {dimension_semantics = [], scalar_prefetch = 0 : i64, scratch_operands = 0 : i64, tpu.core_type = #tpu.core_type<tc>} {
    %c0 = arith.constant 0 : index
    %c0_0 = arith.constant 0 : index
    %0 = vector.load %arg0[%c0, %c0_0] : memref<256x3xf32, #tpu.memory_space<vmem>>, vector<256x3xf32>
    %c0_1 = arith.constant 0 : index
    %c0_2 = arith.constant 0 : index
    %1 = vector.load %arg1[%c0_1, %c0_2] : memref<3x32xf32, #tpu.memory_space<vmem>>, vector<3x32xf32>
    %cst = arith.constant dense<0.000000e+00> : vector<256x32xf32>
    %2 = tpu.matmul %0, %1, %cst {dimension_numbers = #tpu.dot_dimension_numbers<[1], [0], [0], [1], [0, 0, 1, 1], [], []>} : vector<256x3xf32>, vector<3x32xf32>, vector<256x32xf32> -> vector<256x32xf32>
    %c0_3 = arith.constant 0 : index
    %c0_4 = arith.constant 0 : index
    %3 = vector.load %arg2[%c0_3, %c0_4] : memref<1x32xf32, #tpu.memory_space<vmem>>, vector<1x32xf32>
    %4 = vector.broadcast %3 : vector<1x32xf32> to vector<256x32xf32>
    %5 = arith.addf %2, %4 : vector<256x32xf32>
    %cst_5 = arith.constant 0.000000e+00 : f32
    %6 = vector.broadcast %cst_5 : f32 to vector<256x32xf32>
    %7 = arith.maximumf %5, %6 : vector<256x32xf32>
    %c0_6 = arith.constant 0 : index
    %c0_7 = arith.constant 0 : index
    %8 = vector.load %arg3[%c0_6, %c0_7] : memref<32x32xf32, #tpu.memory_space<vmem>>, vector<32x32xf32>
    %cst_8 = arith.constant dense<0.000000e+00> : vector<256x32xf32>
    %9 = tpu.matmul %7, %8, %cst_8 {dimension_numbers = #tpu.dot_dimension_numbers<[1], [0], [0], [1], [0, 0, 1, 1], [], []>} : vector<256x32xf32>, vector<32x32xf32>, vector<256x32xf32> -> vector<256x32xf32>
    %c0_9 = arith.constant 0 : index
    %c0_10 = arith.constant 0 : index
    %10 = vector.load %arg4[%c0_9, %c0_10] : memref<1x32xf32, #tpu.memory_space<vmem>>, vector<1x32xf32>
    %11 = vector.broadcast %10 : vector<1x32xf32> to vector<256x32xf32>
    %12 = arith.addf %9, %11 : vector<256x32xf32>
    %cst_11 = arith.constant 0.000000e+00 : f32
    %13 = vector.broadcast %cst_11 : f32 to vector<256x32xf32>
    %14 = arith.maximumf %12, %13 : vector<256x32xf32>
    %c0_12 = arith.constant 0 : index
    %c0_13 = arith.constant 0 : index
    %15 = vector.load %arg5[%c0_12, %c0_13] : memref<4x256xf32, #tpu.memory_space<vmem>>, vector<4x256xf32>
    %cst_14 = arith.constant dense<0.000000e+00> : vector<4x32xf32>
    %16 = tpu.matmul %15, %14, %cst_14 {dimension_numbers = #tpu.dot_dimension_numbers<[1], [0], [0], [1], [0, 0, 1, 1], [], []>} : vector<4x256xf32>, vector<256x32xf32>, vector<4x32xf32> -> vector<4x32xf32>
    %c0_15 = arith.constant 0 : index
    %c0_16 = arith.constant 0 : index
    %17 = vector.load %arg6[%c0_15, %c0_16] : memref<4x32xf32, #tpu.memory_space<vmem>>, vector<4x32xf32>
    tpu.vector_store %arg6[%c0_15, %c0_16], %16 {strides = array<i32>} : memref<4x32xf32, #tpu.memory_space<vmem>>, vector<4x32xf32>,
    return
  }
}

</mosaic_0001>

<llo_original>
// kernel: tpu_custom_call.1
$region0: #{tpu_custom_call.1}
  #allocation0 [shape = 'u32[]', space=smem, size = 0x4, offset = 0x4, fixed_abs, tag = 'smem constant byte address 0x4 - core index']
  #allocation1 [shape = 'u32[144,128]{1,0:T(1,128)}', space=vmem, size = 0x12000, scoped, tag = 'internal scratch']
  %s0 = inlined_call_operand.vmem [shape: f32[256,3], index: 0, kind: input, shape index: {}]
  %s1 = inlined_call_operand.vmem [shape: f32[3,32], index: 1, kind: input, shape index: {}]
  %s2 = inlined_call_operand.vmem [shape: f32[1,32], index: 2, kind: input, shape index: {}]
  %s3 = inlined_call_operand.vmem [shape: f32[32,32], index: 3, kind: input, shape index: {}]
  %s4 = inlined_call_operand.vmem [shape: f32[1,32], index: 4, kind: input, shape index: {}]
  %s5 = inlined_call_operand.vmem [shape: f32[4,256], index: 5, kind: input, shape index: {}]
  %s6 = inlined_call_operand.hbm [shape: f32[4,32], index: 6, kind: output, shape index: {}]
  %s7 = sld [smem:[#allocation0]]
  $region34: #{tpu_custom_call.1} parent=0
    _
  %s9 = ssub.s32 1, %s7
  %s10 = scalar_select 0, %s9, %s7
  $region1: #{tpu_custom_call.1} parent=0
    #allocation2 [shape = 'u8[2048]{0}', space=vmem, size = 0x800, scoped, tag = 'output window, operand 0, single buffered']
    #allocation3 [shape = 's32[1]{0}', space=sflag, size = 0x4, scoped, tag = 'scoped memory for tpu_custom_call.1']
    %11 = vsyncpa [#allocation3], 0
    // Predicated region
    $region2: #{tpu_custom_call.1} parent=1 // pred_check
      _
    $region3: #{tpu_custom_call.1} parent=1 // pred_check_branch
      %13 = sbr.rel (0) target = $region5
    $region4: #{tpu_custom_call.1} parent=1 // pred_region
      _
    $region5: #{tpu_custom_call.1} parent=1 // pred_fallthru
      _
    // Predicated region
    $region6: #{tpu_custom_call.1} parent=1 // pred_check
      _
    $region7: #{tpu_custom_call.1} parent=1 // pred_check_branch
      %15 = sbr.rel (0) target = $region9
    $region8: #{tpu_custom_call.1} parent=1 // pred_region
      _
    $region9: #{tpu_custom_call.1} parent=1 // pred_fallthru
      _
    // Predicated region
    $region10: #{tpu_custom_call.1} parent=1 // pred_check
      _
    $region11: #{tpu_custom_call.1} parent=1 // pred_check_branch
      %17 = sbr.rel (0) target = $region13
    $region12: #{tpu_custom_call.1} parent=1 // pred_region
      _
    $region13: #{tpu_custom_call.1} parent=1 // pred_fallthru
      _
    // Predicated region
    $region14: #{tpu_custom_call.1} parent=1 // pred_check
      _
    $region15: #{tpu_custom_call.1} parent=1 // pred_check_branch
      %19 = sbr.rel (0) target = $region17
    $region16: #{tpu_custom_call.1} parent=1 // pred_region
      _
    $region17: #{tpu_custom_call.1} parent=1 // pred_fallthru
      _
    // Predicated region
    $region18: #{tpu_custom_call.1} parent=1 // pred_check
      _
    $region19: #{tpu_custom_call.1} parent=1 // pred_check_branch
      %21 = sbr.rel (0) target = $region21
    $region20: #{tpu_custom_call.1} parent=1 // pred_region
      _
    $region21: #{tpu_custom_call.1} parent=1 // pred_fallthru
      _
    // Predicated region
    $region22: #{tpu_custom_call.1} parent=1 // pred_check
      _
    $region23: #{tpu_custom_call.1} parent=1 // pred_check_branch
      %23 = sbr.rel (0) target = $region25
    $region24: #{tpu_custom_call.1} parent=1 // pred_region
      _
    $region25: #{tpu_custom_call.1} parent=1 // pred_fallthru
      _
    %v24 = vld [vmem:[%s0] sm:$0xff]
    %v25 = vld [vmem:[%s0 + $0x8] sm:$0xff]
    %v26 = vld [vmem:[%s0 + $0x10] sm:$0xff]
    %v27 = vld [vmem:[%s0 + $0x18] sm:$0xff]
    %v28 = vld [vmem:[%s0 + $0x20] sm:$0xff]
    %v29 = vld [vmem:[%s0 + $0x28] sm:$0xff]
    %v30 = vld [vmem:[%s0 + $0x30] sm:$0xff]
    %v31 = vld [vmem:[%s0 + $0x38] sm:$0xff]
    %v32 = vld [vmem:[%s0 + $0x40] sm:$0xff]
    %v33 = vld [vmem:[%s0 + $0x48] sm:$0xff]
    %v34 = vld [vmem:[%s0 + $0x50] sm:$0xff]
    %v35 = vld [vmem:[%s0 + $0x58] sm:$0xff]
    %v36 = vld [vmem:[%s0 + $0x60] sm:$0xff]
    %v37 = vld [vmem:[%s0 + $0x68] sm:$0xff]
    %v38 = vld [vmem:[%s0 + $0x70] sm:$0xff]
    %v39 = vld [vmem:[%s0 + $0x78] sm:$0xff]
    %v40 = vld [vmem:[%s0 + $0x80] sm:$0xff]
    %v41 = vld [vmem:[%s0 + $0x88] sm:$0xff]
    %v42 = vld [vmem:[%s0 + $0x90] sm:$0xff]
    %v43 = vld [vmem:[%s0 + $0x98] sm:$0xff]
    %v44 = vld [vmem:[%s0 + $0xa0] sm:$0xff]
    %v45 = vld [vmem:[%s0 + $0xa8] sm:$0xff]
    %v46 = vld [vmem:[%s0 + $0xb0] sm:$0xff]
    %v47 = vld [vmem:[%s0 + $0xb8] sm:$0xff]
    %v48 = vld [vmem:[%s0 + $0xc0] sm:$0xff]
    %v49 = vld [vmem:[%s0 + $0xc8] sm:$0xff]
    %v50 = vld [vmem:[%s0 + $0xd0] sm:$0xff]
    %v51 = vld [vmem:[%s0 + $0xd8] sm:$0xff]
    %v52 = vld [vmem:[%s0 + $0xe0] sm:$0xff]
    %v53 = vld [vmem:[%s0 + $0xe8] sm:$0xff]
    %v54 = vld [vmem:[%s0 + $0xf0] sm:$0xff]
    %v55 = vld [vmem:[%s0 + $0xf8] sm:$0xff]
    %v56 = vld [vmem:[%s1] sm:$0x7]
    %v57 = vld [vmem:[%s2] sm:$0x1]
    %v59 = vlaneseq
    %v60 = vshrl.u32 %v59, 7
    %v61 = vsub.s32 0, %v60
    %v62 = vrot.slane %v57, %v61
    %vm64 = vcmask 23552
    %v66 = vsel %vm64, %v24, 0
    %v69 = vsel %vm64, %v25, 0
    %v72 = vsel %vm64, %v26, 0
    %v75 = vsel %vm64, %v27, 0
    %v78 = vsel %vm64, %v28, 0
    %v81 = vsel %vm64, %v29, 0
    %v84 = vsel %vm64, %v30, 0
    %v87 = vsel %vm64, %v31, 0
    %v90 = vsel %vm64, %v32, 0
    %v93 = vsel %vm64, %v33, 0
    %v96 = vsel %vm64, %v34, 0
    %v99 = vsel %vm64, %v35, 0
    %v102 = vsel %vm64, %v36, 0
    %v105 = vsel %vm64, %v37, 0
    %v108 = vsel %vm64, %v38, 0
    %v111 = vsel %vm64, %v39, 0
    %v114 = vsel %vm64, %v40, 0
    %v117 = vsel %vm64, %v41, 0
    %v120 = vsel %vm64, %v42, 0
    %v123 = vsel %vm64, %v43, 0
    %v126 = vsel %vm64, %v44, 0
    %v129 = vsel %vm64, %v45, 0
    %v132 = vsel %vm64, %v46, 0
    %v135 = vsel %vm64, %v47, 0
    %v138 = vsel %vm64, %v48, 0
    %v141 = vsel %vm64, %v49, 0
    %v144 = vsel %vm64, %v50, 0
    %v147 = vsel %vm64, %v51, 0
    %v150 = vsel %vm64, %v52, 0
    %v153 = vsel %vm64, %v53, 0
    %v156 = vsel %vm64, %v54, 0
    %v159 = vsel %vm64, %v55, 0
    %vm161 = vcmask 1042432
    %v163 = vsel %vm161, %v56, 0
    %165 = vmatprep.subr.mxu0 0.0
    %166 = vmatpush1.msra.mxu0 %v163
    %167 = vmatprep.subr.mxu0 0.0
    %168 = vmatpush1.msra.mxu0 0.0
    %169 = vmatprep.subr.mxu0 0.0
    %170 = vmatpush1.msra.mxu0 0.0
    %171 = vmatprep.subr.mxu0 0.0
    %172 = vmatpush1.msra.mxu0 0.0
    %173 = vmatprep.subr.mxu0 0.0
    %174 = vmatpush1.msra.mxu0 0.0
    %175 = vmatprep.subr.mxu0 0.0
    %176 = vmatpush1.msra.mxu0 0.0
    %177 = vmatprep.subr.mxu0 0.0
    %178 = vmatpush1.msra.mxu0 0.0
    %179 = vmatprep.subr.mxu0 0.0
    %180 = vmatpush1.msra.mxu0 0.0
    %181 = vmatprep.subr.mxu0 0.0
    %182 = vmatpush1.msra.mxu0 0.0
    %183 = vmatprep.subr.mxu0 0.0
    %184 = vmatpush1.msra.mxu0 0.0
    %185 = vmatprep.subr.mxu0 0.0
    %186 = vmatpush1.msra.mxu0 0.0
    %187 = vmatprep.subr.mxu0 0.0
    %188 = vmatpush1.msra.mxu0 0.0
    %189 = vmatprep.subr.mxu0 0.0
    %190 = vmatpush1.msra.mxu0 0.0
    %191 = vmatprep.subr.mxu0 0.0
    %192 = vmatpush1.msra.mxu0 0.0
    %193 = vmatprep.subr.mxu0 0.0
    %194 = vmatpush1.msra.mxu0 0.0
    %195 = vmatprep.subr.mxu0 0.0
    %196 = vmatpush1.msra.mxu0 0.0
    %197 = vmatprep.subr.mxu0 0.0
    %198 = vmatpush1.msra.mxu0 0.0
    %199 = vmatprep.subr.mxu0 0.0
    %200 = vmatpush1.msra.mxu0 0.0
    %201 = vmatprep.subr.mxu0 0.0
    %202 = vmatpush1.msra.mxu0 0.0
    %203 = vmatprep.subr.mxu0 0.0
    %204 = vmatpush1.msra.mxu0 0.0
    %205 = vmatprep.subr.mxu0 0.0
    %206 = vmatpush1.msra.mxu0 0.0
    %207 = vmatprep.subr.mxu0 0.0
    %208 = vmatpush1.msra.mxu0 0.0
    %209 = vmatprep.subr.mxu0 0.0
    %210 = vmatpush1.msra.mxu0 0.0
    %211 = vmatprep.subr.mxu0 0.0
    %212 = vmatpush1.msra.mxu0 0.0
    %213 = vmatprep.subr.mxu0 0.0
    %214 = vmatpush1.msra.mxu0 0.0
    %215 = vmatprep.subr.mxu0 0.0
    %216 = vmatpush1.msra.mxu0 0.0
    %217 = vmatprep.subr.mxu0 0.0
    %218 = vmatpush1.msra.mxu0 0.0
    %219 = vmatprep.subr.mxu0 0.0
    %220 = vmatpush1.msra.mxu0 0.0
    %221 = vmatprep.subr.mxu0 0.0
    %222 = vmatpush1.msra.mxu0 0.0
    %223 = vmatprep.subr.mxu0 0.0
    %224 = vmatpush1.msra.mxu0 0.0
    %225 = vmatprep.subr.mxu0 0.0
    %226 = vmatpush1.msra.mxu0 0.0
    %227 = vmatprep.subr.mxu0 0.0
    %228 = vmatpush1.msra.mxu0 0.0
    %229 = vmatprep.mubr.f32.mxu0 0.0
    %230 = vmatmul.mubr.f32.gmra.mrb[0].mxu0 %v66
    %v231 = vpop.f32.mrb[0].mxu0
    %v232 = vadd.f32 %v62, %v231
    %v233 = vpop.f32.mrb[0].mxu0
    %234 = vmatprep.mubr.f32.mxu0 0.0
    %235 = vmatmul.mubr.f32.gmra.mrb[0].mxu0 %v69
    %v236 = vpop.f32.mrb[0].mxu0
    %v237 = vadd.f32 %v62, %v236
    %v238 = vpop.f32.mrb[0].mxu0
    %239 = vmatprep.mubr.f32.mxu0 0.0
    %240 = vmatmul.mubr.f32.gmra.mrb[0].mxu0 %v72
    %v241 = vpop.f32.mrb[0].mxu0
    %v242 = vadd.f32 %v62, %v241
    %v243 = vpop.f32.mrb[0].mxu0
    %244 = vmatprep.mubr.f32.mxu0 0.0
    %245 = vmatmul.mubr.f32.gmra.mrb[0].mxu0 %v75
    %v246 = vpop.f32.mrb[0].mxu0
    %v247 = vadd.f32 %v62, %v246
    %v248 = vpop.f32.mrb[0].mxu0
    %249 = vmatprep.mubr.f32.mxu0 0.0
    %250 = vmatmul.mubr.f32.gmra.mrb[0].mxu0 %v78
    %v251 = vpop.f32.mrb[0].mxu0
    %v252 = vadd.f32 %v62, %v251
    %v253 = vpop.f32.mrb[0].mxu0
    %254 = vmatprep.mubr.f32.mxu0 0.0
    %255 = vmatmul.mubr.f32.gmra.mrb[0].mxu0 %v81
    %v256 = vpop.f32.mrb[0].mxu0
    %v257 = vadd.f32 %v62, %v256
    %v258 = vpop.f32.mrb[0].mxu0
    %259 = vmatprep.mubr.f32.mxu0 0.0
    %260 = vmatmul.mubr.f32.gmra.mrb[0].mxu0 %v84
    %v261 = vpop.f32.mrb[0].mxu0
    %v262 = vadd.f32 %v62, %v261
    %v263 = vpop.f32.mrb[0].mxu0
    %264 = vmatprep.mubr.f32.mxu0 0.0
    %265 = vmatmul.mubr.f32.gmra.mrb[0].mxu0 %v87
    %v266 = vpop.f32.mrb[0].mxu0
    %v267 = vadd.f32 %v62, %v266
    %v268 = vpop.f32.mrb[0].mxu0
    %269 = vmatprep.mubr.f32.mxu0 0.0
    %270 = vmatmul.mubr.f32.gmra.mrb[0].mxu0 %v90
    %v271 = vpop.f32.mrb[0].mxu0
    %v272 = vadd.f32 %v62, %v271
    %v273 = vpop.f32.mrb[0].mxu0
    %274 = vmatprep.mubr.f32.mxu0 0.0
    %275 = vmatmul.mubr.f32.gmra.mrb[0].mxu0 %v93
    %v276 = vpop.f32.mrb[0].mxu0
    %v277 = vadd.f32 %v62, %v276
    %v278 = vpop.f32.mrb[0].mxu0
    %279 = vmatprep.mubr.f32.mxu0 0.0
    %280 = vmatmul.mubr.f32.gmra.mrb[0].mxu0 %v96
    %v281 = vpop.f32.mrb[0].mxu0
    %v282 = vadd.f32 %v62, %v281
    %v283 = vpop.f32.mrb[0].mxu0
    %284 = vmatprep.mubr.f32.mxu0 0.0
    %285 = vmatmul.mubr.f32.gmra.mrb[0].mxu0 %v99
    %v286 = vpop.f32.mrb[0].mxu0
    %v287 = vadd.f32 %v62, %v286
    %v288 = vpop.f32.mrb[0].mxu0
    %289 = vmatprep.mubr.f32.mxu0 0.0
    %290 = vmatmul.mubr.f32.gmra.mrb[0].mxu0 %v102
    %v291 = vpop.f32.mrb[0].mxu0
    %v292 = vadd.f32 %v62, %v291
    %v293 = vpop.f32.mrb[0].mxu0
    %294 = vmatprep.mubr.f32.mxu0 0.0
    %295 = vmatmul.mubr.f32.gmra.mrb[0].mxu0 %v105
    %v296 = vpop.f32.mrb[0].mxu0
    %v297 = vadd.f32 %v62, %v296
    %v298 = vpop.f32.mrb[0].mxu0
    %299 = vmatprep.mubr.f32.mxu0 0.0
    %300 = vmatmul.mubr.f32.gmra.mrb[0].mxu0 %v108
    %v301 = vpop.f32.mrb[0].mxu0
    %v302 = vadd.f32 %v62, %v301
    %v303 = vpop.f32.mrb[0].mxu0
    %304 = vmatprep.mubr.f32.mxu0 0.0
    %305 = vmatmul.mubr.f32.gmra.mrb[0].mxu0 %v111
    %v306 = vpop.f32.mrb[0].mxu0
    %v307 = vadd.f32 %v62, %v306
    %v308 = vpop.f32.mrb[0].mxu0
    %309 = vmatprep.mubr.f32.mxu0 0.0
    %310 = vmatmul.mubr.f32.gmra.mrb[0].mxu0 %v114
    %v311 = vpop.f32.mrb[0].mxu0
    %v312 = vadd.f32 %v62, %v311
    %v313 = vpop.f32.mrb[0].mxu0
    %314 = vmatprep.mubr.f32.mxu0 0.0
    %315 = vmatmul.mubr.f32.gmra.mrb[0].mxu0 %v117
    %v316 = vpop.f32.mrb[0].mxu0
    %v317 = vadd.f32 %v62, %v316
    %v318 = vpop.f32.mrb[0].mxu0
    %319 = vmatprep.mubr.f32.mxu0 0.0
    %320 = vmatmul.mubr.f32.gmra.mrb[0].mxu0 %v120
    %v321 = vpop.f32.mrb[0].mxu0
    %v322 = vadd.f32 %v62, %v321
    %v323 = vpop.f32.mrb[0].mxu0
    %324 = vmatprep.mubr.f32.mxu0 0.0
    %325 = vmatmul.mubr.f32.gmra.mrb[0].mxu0 %v123
    %v326 = vpop.f32.mrb[0].mxu0
    %v327 = vadd.f32 %v62, %v326
    %v328 = vpop.f32.mrb[0].mxu0
    %329 = vmatprep.mubr.f32.mxu0 0.0
    %330 = vmatmul.mubr.f32.gmra.mrb[0].mxu0 %v126
    %v331 = vpop.f32.mrb[0].mxu0
    %v332 = vadd.f32 %v62, %v331
    %v333 = vpop.f32.mrb[0].mxu0
    %334 = vmatprep.mubr.f32.mxu0 0.0
    %335 = vmatmul.mubr.f32.gmra.mrb[0].mxu0 %v129
    %v336 = vpop.f32.mrb[0].mxu0
    %v337 = vadd.f32 %v62, %v336
    %v338 = vpop.f32.mrb[0].mxu0
    %339 = vmatprep.mubr.f32.mxu0 0.0
    %340 = vmatmul.mubr.f32.gmra.mrb[0].mxu0 %v132
    %v341 = vpop.f32.mrb[0].mxu0
    %v342 = vadd.f32 %v62, %v341
    %v343 = vpop.f32.mrb[0].mxu0
    %344 = vmatprep.mubr.f32.mxu0 0.0
    %345 = vmatmul.mubr.f32.gmra.mrb[0].mxu0 %v135
    %v346 = vpop.f32.mrb[0].mxu0
    %v347 = vadd.f32 %v62, %v346
    %v348 = vpop.f32.mrb[0].mxu0
    %349 = vmatprep.mubr.f32.mxu0 0.0
    %350 = vmatmul.mubr.f32.gmra.mrb[0].mxu0 %v138
    %v351 = vpop.f32.mrb[0].mxu0
    %v352 = vadd.f32 %v62, %v351
    %v353 = vpop.f32.mrb[0].mxu0
    %354 = vmatprep.mubr.f32.mxu0 0.0
    %355 = vmatmul.mubr.f32.gmra.mrb[0].mxu0 %v141
    %v356 = vpop.f32.mrb[0].mxu0
    %v357 = vadd.f32 %v62, %v356
    %v358 = vpop.f32.mrb[0].mxu0
    %359 = vmatprep.mubr.f32.mxu0 0.0
    %360 = vmatmul.mubr.f32.gmra.mrb[0].mxu0 %v144
    %v361 = vpop.f32.mrb[0].mxu0
    %v362 = vadd.f32 %v62, %v361
    %v363 = vpop.f32.mrb[0].mxu0
    %364 = vmatprep.mubr.f32.mxu0 0.0
    %365 = vmatmul.mubr.f32.gmra.mrb[0].mxu0 %v147
    %v366 = vpop.f32.mrb[0].mxu0
    %v367 = vadd.f32 %v62, %v366
    %v368 = vpop.f32.mrb[0].mxu0
    %369 = vmatprep.mubr.f32.mxu0 0.0
    %370 = vmatmul.mubr.f32.gmra.mrb[0].mxu0 %v150
    %v371 = vpop.f32.mrb[0].mxu0
    %v372 = vadd.f32 %v62, %v371
    %v373 = vpop.f32.mrb[0].mxu0
    %374 = vmatprep.mubr.f32.mxu0 0.0
    %375 = vmatmul.mubr.f32.gmra.mrb[0].mxu0 %v153
    %v376 = vpop.f32.mrb[0].mxu0
    %v377 = vadd.f32 %v62, %v376
    %v378 = vpop.f32.mrb[0].mxu0
    %379 = vmatprep.mubr.f32.mxu0 0.0
    %380 = vmatmul.mubr.f32.gmra.mrb[0].mxu0 %v156
    %v381 = vpop.f32.mrb[0].mxu0
    %v382 = vadd.f32 %v62, %v381
    %v383 = vpop.f32.mrb[0].mxu0
    %384 = vmatprep.mubr.f32.mxu0 0.0
    %385 = vmatmul.mubr.f32.gmra.mrb[0].mxu0 %v159
    %v386 = vpop.f32.mrb[0].mxu0
    %v387 = vadd.f32 %v62, %v386
    %v388 = vpop.f32.mrb[0].mxu0
    %389 = vdwg.mxu0
    %v390 = vmax.f32 %v232, 0.0
    %v391 = vmax.f32 %v237, 0.0
    %v392 = vmax.f32 %v242, 0.0
    %v393 = vmax.f32 %v247, 0.0
    %v394 = vmax.f32 %v252, 0.0
    %v395 = vmax.f32 %v257, 0.0
    %v396 = vmax.f32 %v262, 0.0
    %v397 = vmax.f32 %v267, 0.0
    %v398 = vmax.f32 %v272, 0.0
    %v399 = vmax.f32 %v277, 0.0
    %v400 = vmax.f32 %v282, 0.0
    %v401 = vmax.f32 %v287, 0.0
    %v402 = vmax.f32 %v292, 0.0
    %v403 = vmax.f32 %v297, 0.0
    %v404 = vmax.f32 %v302, 0.0
    %v405 = vmax.f32 %v307, 0.0
    %v406 = vmax.f32 %v312, 0.0
    %v407 = vmax.f32 %v317, 0.0
    %v408 = vmax.f32 %v322, 0.0
    %v409 = vmax.f32 %v327, 0.0
    %v410 = vmax.f32 %v332, 0.0
    %v411 = vmax.f32 %v337, 0.0
    %v412 = vmax.f32 %v342, 0.0
    %v413 = vmax.f32 %v347, 0.0
    %v414 = vmax.f32 %v352, 0.0
    %v415 = vmax.f32 %v357, 0.0
    %v416 = vmax.f32 %v362, 0.0
    %v417 = vmax.f32 %v367, 0.0
    %v418 = vmax.f32 %v372, 0.0
    %v419 = vmax.f32 %v377, 0.0
    %v420 = vmax.f32 %v382, 0.0
    %v421 = vmax.f32 %v387, 0.0
    %v422 = vld [vmem:[%s3] sm:$0xff]
    %v423 = vld [vmem:[%s3 + $0x8] sm:$0xff]
    %v424 = vld [vmem:[%s3 + $0x10] sm:$0xff]
    %v425 = vld [vmem:[%s3 + $0x18] sm:$0xff]
    %v426 = vld [vmem:[%s4] sm:$0x1]
    %v428 = vlaneseq
    %v429 = vshrl.u32 %v428, 7
    %v430 = vsub.s32 0, %v429
    %v431 = vrot.slane %v426, %v430
    %vm433 = vcmask 261120
    %v435 = vsel %vm433, %v390, 0
    %v438 = vsel %vm433, %v391, 0
    %v441 = vsel %vm433, %v392, 0
    %v444 = vsel %vm433, %v393, 0
    %v447 = vsel %vm433, %v394, 0
    %v450 = vsel %vm433, %v395, 0
    %v453 = vsel %vm433, %v396, 0
    %v456 = vsel %vm433, %v397, 0
    %v459 = vsel %vm433, %v398, 0
    %v462 = vsel %vm433, %v399, 0
    %v465 = vsel %vm433, %v400, 0
    %v468 = vsel %vm433, %v401, 0
    %v471 = vsel %vm433, %v402, 0
    %v474 = vsel %vm433, %v403, 0
    %v477 = vsel %vm433, %v404, 0
    %v480 = vsel %vm433, %v405, 0
    %v483 = vsel %vm433, %v406, 0
    %v486 = vsel %vm433, %v407, 0
    %v489 = vsel %vm433, %v408, 0
    %v492 = vsel %vm433, %v409, 0
    %v495 = vsel %vm433, %v410, 0
    %v498 = vsel %vm433, %v411, 0
    %v501 = vsel %vm433, %v412, 0
    %v504 = vsel %vm433, %v413, 0
    %v507 = vsel %vm433, %v414, 0
    %v510 = vsel %vm433, %v415, 0
    %v513 = vsel %vm433, %v416, 0
    %v516 = vsel %vm433, %v417, 0
    %v519 = vsel %vm433, %v418, 0
    %v522 = vsel %vm433, %v419, 0
    %v525 = vsel %vm433, %v420, 0
    %v528 = vsel %vm433, %v421, 0
    %530 = vmatprep.subr.mxu0 0.0
    %531 = vmatpush1.msra.mxu0 %v422
    %532 = vmatprep.subr.mxu0 0.0
    %533 = vmatpush1.msra.mxu0 %v423
    %534 = vmatprep.subr.mxu0 0.0
    %535 = vmatpush1.msra.mxu0 %v424
    %536 = vmatprep.subr.mxu0 0.0
    %537 = vmatpush1.msra.mxu0 %v425
    %538 = vmatprep.subr.mxu0 0.0
    %539 = vmatpush1.msra.mxu0 0.0
    %540 = vmatprep.subr.mxu0 0.0
    %541 = vmatpush1.msra.mxu0 0.0
    %542 = vmatprep.subr.mxu0 0.0
    %543 = vmatpush1.msra.mxu0 0.0
    %544 = vmatprep.subr.mxu0 0.0
    %545 = vmatpush1.msra.mxu0 0.0
    %546 = vmatprep.subr.mxu0 0.0
    %547 = vmatpush1.msra.mxu0 0.0
    %548 = vmatprep.subr.mxu0 0.0
    %549 = vmatpush1.msra.mxu0 0.0
    %550 = vmatprep.subr.mxu0 0.0
    %551 = vmatpush1.msra.mxu0 0.0
    %552 = vmatprep.subr.mxu0 0.0
    %553 = vmatpush1.msra.mxu0 0.0
    %554 = vmatprep.subr.mxu0 0.0
    %555 = vmatpush1.msra.mxu0 0.0
    %556 = vmatprep.subr.mxu0 0.0
    %557 = vmatpush1.msra.mxu0 0.0
    %558 = vmatprep.subr.mxu0 0.0
    %559 = vmatpush1.msra.mxu0 0.0
    %560 = vmatprep.subr.mxu0 0.0
    %561 = vmatpush1.msra.mxu0 0.0
    %562 = vmatprep.subr.mxu0 0.0
    %563 = vmatpush1.msra.mxu0 0.0
    %564 = vmatprep.subr.mxu0 0.0
    %565 = vmatpush1.msra.mxu0 0.0
    %566 = vmatprep.subr.mxu0 0.0
    %567 = vmatpush1.msra.mxu0 0.0
    %568 = vmatprep.subr.mxu0 0.0
    %569 = vmatpush1.msra.mxu0 0.0
    %570 = vmatprep.subr.mxu0 0.0
    %571 = vmatpush1.msra.mxu0 0.0
    %572 = vmatprep.subr.mxu0 0.0
    %573 = vmatpush1.msra.mxu0 0.0
    %574 = vmatprep.subr.mxu0 0.0
    %575 = vmatpush1.msra.mxu0 0.0
    %576 = vmatprep.subr.mxu0 0.0
    %577 = vmatpush1.msra.mxu0 0.0
    %578 = vmatprep.subr.mxu0 0.0
    %579 = vmatpush1.msra.mxu0 0.0
    %580 = vmatprep.subr.mxu0 0.0
    %581 = vmatpush1.msra.mxu0 0.0
    %582 = vmatprep.subr.mxu0 0.0
    %583 = vmatpush1.msra.mxu0 0.0
    %584 = vmatprep.subr.mxu0 0.0
    %585 = vmatpush1.msra.mxu0 0.0
    %586 = vmatprep.subr.mxu0 0.0
    %587 = vmatpush1.msra.mxu0 0.0
    %588 = vmatprep.subr.mxu0 0.0
    %589 = vmatpush1.msra.mxu0 0.0
    %590 = vmatprep.subr.mxu0 0.0
    %591 = vmatpush1.msra.mxu0 0.0
    %592 = vmatprep.subr.mxu0 0.0
    %593 = vmatpush1.msra.mxu0 0.0
    %594 = vmatprep.mubr.f32.mxu0 0.0
    %595 = vmatmul.mubr.f32.gmra.mrb[0].mxu0 %v435
    %v596 = vpop.f32.mrb[0].mxu0
    %v597 = vadd.f32 %v431, %v596
    %v598 = vpop.f32.mrb[0].mxu0
    %599 = vmatprep.mubr.f32.mxu0 0.0
    %600 = vmatmul.mubr.f32.gmra.mrb[0].mxu0 %v438
    %v601 = vpop.f32.mrb[0].mxu0
    %v602 = vadd.f32 %v431, %v601
    %v603 = vpop.f32.mrb[0].mxu0
    %604 = vmatprep.mubr.f32.mxu0 0.0
    %605 = vmatmul.mubr.f32.gmra.mrb[0].mxu0 %v441
    %v606 = vpop.f32.mrb[0].mxu0
    %v607 = vadd.f32 %v431, %v606
    %v608 = vpop.f32.mrb[0].mxu0
    %609 = vmatprep.mubr.f32.mxu0 0.0
    %610 = vmatmul.mubr.f32.gmra.mrb[0].mxu0 %v444
    %v611 = vpop.f32.mrb[0].mxu0
    %v612 = vadd.f32 %v431, %v611
    %v613 = vpop.f32.mrb[0].mxu0
    %614 = vmatprep.mubr.f32.mxu0 0.0
    %615 = vmatmul.mubr.f32.gmra.mrb[0].mxu0 %v447
    %v616 = vpop.f32.mrb[0].mxu0
    %v617 = vadd.f32 %v431, %v616
    %v618 = vpop.f32.mrb[0].mxu0
    %619 = vmatprep.mubr.f32.mxu0 0.0
    %620 = vmatmul.mubr.f32.gmra.mrb[0].mxu0 %v450
    %v621 = vpop.f32.mrb[0].mxu0
    %v622 = vadd.f32 %v431, %v621
    %v623 = vpop.f32.mrb[0].mxu0
    %624 = vmatprep.mubr.f32.mxu0 0.0
    %625 = vmatmul.mubr.f32.gmra.mrb[0].mxu0 %v453
    %v626 = vpop.f32.mrb[0].mxu0
    %v627 = vadd.f32 %v431, %v626
    %v628 = vpop.f32.mrb[0].mxu0
    %629 = vmatprep.mubr.f32.mxu0 0.0
    %630 = vmatmul.mubr.f32.gmra.mrb[0].mxu0 %v456
    %v631 = vpop.f32.mrb[0].mxu0
    %v632 = vadd.f32 %v431, %v631
    %v633 = vpop.f32.mrb[0].mxu0
    %634 = vmatprep.mubr.f32.mxu0 0.0
    %635 = vmatmul.mubr.f32.gmra.mrb[0].mxu0 %v459
    %v636 = vpop.f32.mrb[0].mxu0
    %v637 = vadd.f32 %v431, %v636
    %v638 = vpop.f32.mrb[0].mxu0
    %639 = vmatprep.mubr.f32.mxu0 0.0
    %640 = vmatmul.mubr.f32.gmra.mrb[0].mxu0 %v462
    %v641 = vpop.f32.mrb[0].mxu0
    %v642 = vadd.f32 %v431, %v641
    %v643 = vpop.f32.mrb[0].mxu0
    %644 = vmatprep.mubr.f32.mxu0 0.0
    %645 = vmatmul.mubr.f32.gmra.mrb[0].mxu0 %v465
    %v646 = vpop.f32.mrb[0].mxu0
    %v647 = vadd.f32 %v431, %v646
    %v648 = vpop.f32.mrb[0].mxu0
    %649 = vmatprep.mubr.f32.mxu0 0.0
    %650 = vmatmul.mubr.f32.gmra.mrb[0].mxu0 %v468
    %v651 = vpop.f32.mrb[0].mxu0
    %v652 = vadd.f32 %v431, %v651
    %v653 = vpop.f32.mrb[0].mxu0
    %654 = vmatprep.mubr.f32.mxu0 0.0
    %655 = vmatmul.mubr.f32.gmra.mrb[0].mxu0 %v471
    %v656 = vpop.f32.mrb[0].mxu0
    %v657 = vadd.f32 %v431, %v656
    %v658 = vpop.f32.mrb[0].mxu0
    %659 = vmatprep.mubr.f32.mxu0 0.0
    %660 = vmatmul.mubr.f32.gmra.mrb[0].mxu0 %v474
    %v661 = vpop.f32.mrb[0].mxu0
    %v662 = vadd.f32 %v431, %v661
    %v663 = vpop.f32.mrb[0].mxu0
    %664 = vmatprep.mubr.f32.mxu0 0.0
    %665 = vmatmul.mubr.f32.gmra.mrb[0].mxu0 %v477
    %v666 = vpop.f32.mrb[0].mxu0
    %v667 = vadd.f32 %v431, %v666
    %v668 = vpop.f32.mrb[0].mxu0
    %669 = vmatprep.mubr.f32.mxu0 0.0
    %670 = vmatmul.mubr.f32.gmra.mrb[0].mxu0 %v480
    %v671 = vpop.f32.mrb[0].mxu0
    %v672 = vadd.f32 %v431, %v671
    %v673 = vpop.f32.mrb[0].mxu0
    %674 = vmatprep.mubr.f32.mxu0 0.0
    %675 = vmatmul.mubr.f32.gmra.mrb[0].mxu0 %v483
    %v676 = vpop.f32.mrb[0].mxu0
    %v677 = vadd.f32 %v431, %v676
    %v678 = vpop.f32.mrb[0].mxu0
    %679 = vmatprep.mubr.f32.mxu0 0.0
    %680 = vmatmul.mubr.f32.gmra.mrb[0].mxu0 %v486
    %v681 = vpop.f32.mrb[0].mxu0
    %v682 = vadd.f32 %v431, %v681
    %v683 = vpop.f32.mrb[0].mxu0
    %684 = vmatprep.mubr.f32.mxu0 0.0
    %685 = vmatmul.mubr.f32.gmra.mrb[0].mxu0 %v489
    %v686 = vpop.f32.mrb[0].mxu0
    %v687 = vadd.f32 %v431, %v686
    %v688 = vpop.f32.mrb[0].mxu0
    %689 = vmatprep.mubr.f32.mxu0 0.0
    %690 = vmatmul.mubr.f32.gmra.mrb[0].mxu0 %v492
    %v691 = vpop.f32.mrb[0].mxu0
    %v692 = vadd.f32 %v431, %v691
    %v693 = vpop.f32.mrb[0].mxu0
    %694 = vmatprep.mubr.f32.mxu0 0.0
    %695 = vmatmul.mubr.f32.gmra.mrb[0].mxu0 %v495
    %v696 = vpop.f32.mrb[0].mxu0
    %v697 = vadd.f32 %v431, %v696
    %v698 = vpop.f32.mrb[0].mxu0
    %699 = vmatprep.mubr.f32.mxu0 0.0
    %700 = vmatmul.mubr.f32.gmra.mrb[0].mxu0 %v498
    %v701 = vpop.f32.mrb[0].mxu0
    %v702 = vadd.f32 %v431, %v701
    %v703 = vpop.f32.mrb[0].mxu0
    %704 = vmatprep.mubr.f32.mxu0 0.0
    %705 = vmatmul.mubr.f32.gmra.mrb[0].mxu0 %v501
    %v706 = vpop.f32.mrb[0].mxu0
    %v707 = vadd.f32 %v431, %v706
    %v708 = vpop.f32.mrb[0].mxu0
    %709 = vmatprep.mubr.f32.mxu0 0.0
    %710 = vmatmul.mubr.f32.gmra.mrb[0].mxu0 %v504
    %v711 = vpop.f32.mrb[0].mxu0
    %v712 = vadd.f32 %v431, %v711
    %v713 = vpop.f32.mrb[0].mxu0
    %714 = vmatprep.mubr.f32.mxu0 0.0
    %715 = vmatmul.mubr.f32.gmra.mrb[0].mxu0 %v507
    %v716 = vpop.f32.mrb[0].mxu0
    %v717 = vadd.f32 %v431, %v716
    %v718 = vpop.f32.mrb[0].mxu0
    %719 = vmatprep.mubr.f32.mxu0 0.0
    %720 = vmatmul.mubr.f32.gmra.mrb[0].mxu0 %v510
    %v721 = vpop.f32.mrb[0].mxu0
    %v722 = vadd.f32 %v431, %v721
    %v723 = vpop.f32.mrb[0].mxu0
    %724 = vmatprep.mubr.f32.mxu0 0.0
    %725 = vmatmul.mubr.f32.gmra.mrb[0].mxu0 %v513
    %v726 = vpop.f32.mrb[0].mxu0
    %v727 = vadd.f32 %v431, %v726
    %v728 = vpop.f32.mrb[0].mxu0
    %729 = vmatprep.mubr.f32.mxu0 0.0
    %730 = vmatmul.mubr.f32.gmra.mrb[0].mxu0 %v516
    %v731 = vpop.f32.mrb[0].mxu0
    %v732 = vadd.f32 %v431, %v731
    %v733 = vpop.f32.mrb[0].mxu0
    %734 = vmatprep.mubr.f32.mxu0 0.0
    %735 = vmatmul.mubr.f32.gmra.mrb[0].mxu0 %v519
    %v736 = vpop.f32.mrb[0].mxu0
    %v737 = vadd.f32 %v431, %v736
    %v738 = vpop.f32.mrb[0].mxu0
    %739 = vmatprep.mubr.f32.mxu0 0.0
    %740 = vmatmul.mubr.f32.gmra.mrb[0].mxu0 %v522
    %v741 = vpop.f32.mrb[0].mxu0
    %v742 = vadd.f32 %v431, %v741
    %v743 = vpop.f32.mrb[0].mxu0
    %744 = vmatprep.mubr.f32.mxu0 0.0
    %745 = vmatmul.mubr.f32.gmra.mrb[0].mxu0 %v525
    %v746 = vpop.f32.mrb[0].mxu0
    %v747 = vadd.f32 %v431, %v746
    %v748 = vpop.f32.mrb[0].mxu0
    %749 = vmatprep.mubr.f32.mxu0 0.0
    %750 = vmatmul.mubr.f32.gmra.mrb[0].mxu0 %v528
    %v751 = vpop.f32.mrb[0].mxu0
    %v752 = vadd.f32 %v431, %v751
    %v753 = vpop.f32.mrb[0].mxu0
    %754 = vdwg.mxu0
    %v755 = vmax.f32 %v597, 0.0
    %v756 = vmax.f32 %v602, 0.0
    %v757 = vmax.f32 %v607, 0.0
    %v758 = vmax.f32 %v612, 0.0
    %v759 = vmax.f32 %v617, 0.0
    %v760 = vmax.f32 %v622, 0.0
    %v761 = vmax.f32 %v627, 0.0
    %v762 = vmax.f32 %v632, 0.0
    %v763 = vmax.f32 %v637, 0.0
    %v764 = vmax.f32 %v642, 0.0
    %v765 = vmax.f32 %v647, 0.0
    %v766 = vmax.f32 %v652, 0.0
    %v767 = vmax.f32 %v657, 0.0
    %v768 = vmax.f32 %v662, 0.0
    %v769 = vmax.f32 %v667, 0.0
    %v770 = vmax.f32 %v672, 0.0
    %v771 = vmax.f32 %v677, 0.0
    %v772 = vmax.f32 %v682, 0.0
    %v773 = vmax.f32 %v687, 0.0
    %v774 = vmax.f32 %v692, 0.0
    %v775 = vmax.f32 %v697, 0.0
    %v776 = vmax.f32 %v702, 0.0
    %v777 = vmax.f32 %v707, 0.0
    %v778 = vmax.f32 %v712, 0.0
    %v779 = vmax.f32 %v717, 0.0
    %v780 = vmax.f32 %v722, 0.0
    %v781 = vmax.f32 %v727, 0.0
    %v782 = vmax.f32 %v732, 0.0
    %v783 = vmax.f32 %v737, 0.0
    %v784 = vmax.f32 %v742, 0.0
    %v785 = vmax.f32 %v747, 0.0
    %v786 = vmax.f32 %v752, 0.0
    %v787 = vld [vmem:[%s5] sm:$0xff]
    %v789 = vcombine.high %v787, %v787
    %791 = vmatprep.subr.mxu0 0.0
    %792 = vmatpush1.msra.mxu0 %v755
    %793 = vmatprep.subr.mxu0 0.0
    %794 = vmatpush1.msra.mxu0 %v756
    %795 = vmatprep.subr.mxu0 0.0
    %796 = vmatpush1.msra.mxu0 %v757
    %797 = vmatprep.subr.mxu0 0.0
    %798 = vmatpush1.msra.mxu0 %v758
    %799 = vmatprep.subr.mxu0 0.0
    %800 = vmatpush1.msra.mxu0 %v759
    %801 = vmatprep.subr.mxu0 0.0
    %802 = vmatpush1.msra.mxu0 %v760
    %803 = vmatprep.subr.mxu0 0.0
    %804 = vmatpush1.msra.mxu0 %v761
    %805 = vmatprep.subr.mxu0 0.0
    %806 = vmatpush1.msra.mxu0 %v762
    %807 = vmatprep.subr.mxu0 0.0
    %808 = vmatpush1.msra.mxu0 %v763
    %809 = vmatprep.subr.mxu0 0.0
    %810 = vmatpush1.msra.mxu0 %v764
    %811 = vmatprep.subr.mxu0 0.0
    %812 = vmatpush1.msra.mxu0 %v765
    %813 = vmatprep.subr.mxu0 0.0
    %814 = vmatpush1.msra.mxu0 %v766
    %815 = vmatprep.subr.mxu0 0.0
    %816 = vmatpush1.msra.mxu0 %v767
    %817 = vmatprep.subr.mxu0 0.0
    %818 = vmatpush1.msra.mxu0 %v768
    %819 = vmatprep.subr.mxu0 0.0
    %820 = vmatpush1.msra.mxu0 %v769
    %821 = vmatprep.subr.mxu0 0.0
    %822 = vmatpush1.msra.mxu0 %v770
    %823 = vmatprep.subr.mxu0 0.0
    %824 = vmatpush1.msra.mxu0 %v771
    %825 = vmatprep.subr.mxu0 0.0
    %826 = vmatpush1.msra.mxu0 %v772
    %827 = vmatprep.subr.mxu0 0.0
    %828 = vmatpush1.msra.mxu0 %v773
    %829 = vmatprep.subr.mxu0 0.0
    %830 = vmatpush1.msra.mxu0 %v774
    %831 = vmatprep.subr.mxu0 0.0
    %832 = vmatpush1.msra.mxu0 %v775
    %833 = vmatprep.subr.mxu0 0.0
    %834 = vmatpush1.msra.mxu0 %v776
    %835 = vmatprep.subr.mxu0 0.0
    %836 = vmatpush1.msra.mxu0 %v777
    %837 = vmatprep.subr.mxu0 0.0
    %838 = vmatpush1.msra.mxu0 %v778
    %839 = vmatprep.subr.mxu0 0.0
    %840 = vmatpush1.msra.mxu0 %v779
    %841 = vmatprep.subr.mxu0 0.0
    %842 = vmatpush1.msra.mxu0 %v780
    %843 = vmatprep.subr.mxu0 0.0
    %844 = vmatpush1.msra.mxu0 %v781
    %845 = vmatprep.subr.mxu0 0.0
    %846 = vmatpush1.msra.mxu0 %v782
    %847 = vmatprep.subr.mxu0 0.0
    %848 = vmatpush1.msra.mxu0 %v783
    %849 = vmatprep.subr.mxu0 0.0
    %850 = vmatpush1.msra.mxu0 %v784
    %851 = vmatprep.subr.mxu0 0.0
    %852 = vmatpush1.msra.mxu0 %v785
    %853 = vmatprep.subr.mxu0 0.0
    %854 = vmatpush1.msra.mxu0 %v786
    %855 = vmatprep.mubr.f32.mxu0 %v789
    %856 = vmatmul.mubr.f32.gmra.mrb[0].mxu0 %v787
    %v857 = vpop.f32.mrb[0].mxu0
    %v858 = vadd.f32 0.0, %v857
    %v859 = vpop.f32.mrb[0].mxu0
    %860 = vdwg.mxu0
    %vm861 = vcmask 257024
    %862 = vst.msk [vmem:[#allocation2] sm:$0xf] %vm861, %v858
    // Predicated region
    $region26: #{tpu_custom_call.1} parent=1 // pred_check
      _
    $region27: #{tpu_custom_call.1} parent=1 // pred_check_branch
      %864 = sbr.rel (0) target = $region29
    $region28: #{tpu_custom_call.1} parent=1 // pred_region
      %s866 = ssub.s32 64, 64
      %867 = vsyncadd [#allocation3], %s866
      %s869 = sshll.u32 [#allocation2], 4
      %s870 = int_to_ptr.vmem [resolvable:$true] %s869
      %872 = dma.vmem_to_hbm [thread:$0]  %s870, 64, %s6, [#allocation3]
    $region29: #{tpu_custom_call.1} parent=1 // pred_fallthru
      _
    // Predicated region
    $region30: #{tpu_custom_call.1} parent=1 // pred_check
      _
    $region31: #{tpu_custom_call.1} parent=1 // pred_check_branch
      %874 = sbr.rel (0) target = $region33
    $region32: #{tpu_custom_call.1} parent=1 // pred_region
      %875 = dma.done [#allocation3], 64
    $region33: #{tpu_custom_call.1} parent=1 // pred_fallthru
      _
    %876 = vsyncpa [#allocation3], 1

</llo_original>
